<compile_context>
chip_gen: v7x
topology: tpu7x:2x2x1
jax: 0.10.0
libtpu: 0.0.40
codegen_flags: <defaults>
</compile_context>

<pallas_src>
import math

import jax
import jax.numpy as jnp
from jax.experimental import pallas as pl
from jax.experimental.pallas import tpu as pltpu


def _round_up(v, m):
    return ((v + m - 1) // m) * m


def cosine_linear_kernel(sigma_ref, x_ref, w_ref, o_ref, wn_ref):
    # sigma_ref: SMEM (1,) f32
    # x_ref:  (TB, Dp) VMEM   w_ref: (TO, Dp) VMEM   o_ref: (TB, TO) VMEM
    # wn_ref: (TO, Dp) VMEM scratch holding the normalized weight tile in the
    #         MXU feed dtype; persists across the inner batch-tile loop.
    eps = 1e-12  # matches torch.nn.functional.normalize default eps

    # Normalize this weight tile only once per O-tile (batch axis is the
    # innermost grid axis, so program_id(1) == 0 marks a fresh O-tile).
    @pl.when(pl.program_id(1) == 0)
    def _():
        w = w_ref[...].astype(jnp.float32)
        w_ss = jnp.sum(w * w, axis=-1, keepdims=True)
        inv_w = jax.lax.rsqrt(jnp.maximum(w_ss, eps * eps))  # == 1/max(||w||, eps)
        wn_ref[...] = (w * inv_w).astype(wn_ref.dtype)

    x = x_ref[...].astype(jnp.float32)
    x_ss = jnp.sum(x * x, axis=-1, keepdims=True)
    inv_x = jax.lax.rsqrt(jnp.maximum(x_ss, eps * eps))
    # Fold sigma into the per-row x scale: avoids a separate (TB, TO) multiply.
    x_n = (x * (sigma_ref[0] * inv_x)).astype(wn_ref.dtype)

    # Contract the last dim of both operands directly (no .T / XLU transpose):
    # (TB, Dp) x (TO, Dp) -> (TB, TO), f32 accumulation on the MXU.
    out = jax.lax.dot_general(
        x_n, wn_ref[...],
        dimension_numbers=(((1,), (1,)), ((), ())),
        preferred_element_type=jnp.float32)
    o_ref[...] = out.astype(o_ref.dtype)


def cosine_linear(x, weight, sigma, *, mxu_dtype=jnp.bfloat16):
    """x: (B, in_features), weight: (out_features, in_features), sigma: (1,)."""
    B, D = x.shape
    O, D2 = weight.shape
    assert D == D2

    # Lane/sublane friendly tiling. Zero padding is norm-preserving and the
    # padded rows/cols are sliced off before returning.
    Dp = _round_up(D, 128)                    # full (padded) K per tile
    TB = min(_round_up(B, 8), 256)            # batch tile   (sublane multiple)
    TO = min(_round_up(O, 128), 512)          # out tile     (lane-dense >=128)
    Bp = _round_up(B, TB)
    Op = _round_up(O, TO)

    xp = jnp.zeros((Bp, Dp), x.dtype).at[:B, :D].set(x)
    wp = jnp.zeros((Op, Dp), weight.dtype).at[:O, :D].set(weight)

    grid = (Op // TO, Bp // TB)               # O outermost, batch innermost

    out = pl.pallas_call(
        cosine_linear_kernel,
        out_shape=jax.ShapeDtypeStruct((Bp, Op), x.dtype),
        grid_spec=pltpu.PrefetchScalarGridSpec(
            num_scalar_prefetch=0,
            grid=grid,
            in_specs=[
                pl.BlockSpec(memory_space=pltpu.MemorySpace.SMEM),      # sigma
                pl.BlockSpec((TB, Dp), lambda j, i: (i, 0)),            # x
                pl.BlockSpec((TO, Dp), lambda j, i: (j, 0)),            # weight
            ],
            out_specs=pl.BlockSpec((TB, TO), lambda j, i: (i, j)),
            scratch_shapes=[pltpu.VMEM((TO, Dp), mxu_dtype)],
        ),
        compiler_params=pltpu.CompilerParams(
            dimension_semantics=("parallel", "arbitrary"),
            vmem_limit_bytes=48 * 1024 * 1024,
        ),
    )(sigma, xp, wp)

    return out[:B, :O]


def cosine_linear_ref(x, weight, sigma):
    eps = 1e-12
    xn = x / jnp.maximum(jnp.linalg.norm(x, axis=1, keepdims=True), eps)
    wn = weight / jnp.maximum(jnp.linalg.norm(weight, axis=1, keepdims=True), eps)
    return sigma[0] * (xn @ wn.T)


if __name__ == "__main__":
    key = jax.random.PRNGKey(0)
    kx, kw, kx2, kw2 = jax.random.split(key, 4)

    # --- small test matching CosineLinear(in_features=32, out_features=16) ---
    in_features, out_features, batch = 32, 16, 4
    stdv = 1.0 / math.sqrt(in_features)
    weight = jax.random.uniform(
        kw, (out_features, in_features), dtype=jnp.float32,
        minval=-stdv, maxval=stdv)
    sigma = jnp.ones((1,), dtype=jnp.float32)
    x = jax.random.normal(kx, (batch, in_features), dtype=jnp.float32)

    ref = cosine_linear_ref(x, weight, sigma)

    # f32 MXU path: tight tolerance.
    out32 = jax.block_until_ready(
        cosine_linear(x, weight, sigma, mxu_dtype=jnp.float32))
    assert out32.shape == (batch, out_features)
    assert jnp.allclose(out32, ref, atol=1e-5, rtol=1e-5)

    # default bf16 MXU path: looser tolerance (bf16 mantissa).
    out16 = jax.block_until_ready(cosine_linear(x, weight, sigma))
    assert out16.shape == (batch, out_features)
    assert jnp.allclose(out16, ref, atol=2e-2, rtol=2e-2)

    # --- multi-tile test (exercises the (O-tile, B-tile) grid + padding) ---
    B2, D2, O2 = 300, 96, 600
    w2 = jax.random.uniform(kw2, (O2, D2), dtype=jnp.float32,
                            minval=-1.0 / math.sqrt(D2), maxval=1.0 / math.sqrt(D2))
    x2 = jax.random.normal(kx2, (B2, D2), dtype=jnp.float32)
    sigma2 = jnp.full((1,), 2.0, dtype=jnp.float32)

    ref2 = cosine_linear_ref(x2, w2, sigma2)
    out2 = jax.block_until_ready(cosine_linear(x2, w2, sigma2))
    assert out2.shape == (B2, O2)
    assert jnp.allclose(out2, ref2, atol=3e-2, rtol=3e-2)

    print("KERNEL_OK")
</pallas_src>

<mosaic_0001>
module attributes {stable_mosaic.version = 11 : i64} {
  func.func @cosine_linear_kernel(%arg0: i32, %arg1: i32, %arg2: memref<1xf32, #tpu.memory_space<smem>>, %arg3: memref<8x128xf32, #tpu.memory_space<vmem>>, %arg4: memref<128x128xf32, #tpu.memory_space<vmem>>, %arg5: memref<8x128xf32, #tpu.memory_space<vmem>>, %arg6: memref<128x128xf32, #tpu.memory_space<vmem>>) attributes {dimension_semantics = [#tpu.dimension_semantics<parallel>, #tpu.dimension_semantics<arbitrary>], iteration_bounds = array<i64: 1, 1>, scalar_prefetch = 0 : i64, scratch_operands = 1 : i64, tpu.core_type = #tpu.core_type<tc>, window_params = [{transform_indices = @transform_0, window_bounds = array<i64: 1>}, {transform_indices = @transform_1, window_bounds = array<i64: 8, 128>}, {transform_indices = @transform_2, window_bounds = array<i64: 128, 128>}, {transform_indices = @transform_3, window_bounds = array<i64: 8, 128>}]} {
    %c0_i32 = arith.constant 0 : i32
    %0 = arith.cmpi eq, %arg1, %c0_i32 : i32
    %1 = arith.extui %0 : i1 to i32
    %c0_i32_0 = arith.constant 0 : i32
    %2 = arith.cmpi ne, %1, %c0_i32_0 : i32
    scf.if %2 {
      %c0_9 = arith.constant 0 : index
      %c0_10 = arith.constant 0 : index
      %18 = vector.load %arg4[%c0_9, %c0_10] : memref<128x128xf32, #tpu.memory_space<vmem>>, vector<128x128xf32>
      %19 = arith.mulf %18, %18 : vector<128x128xf32>
      %cst_11 = arith.constant dense<0.000000e+00> : vector<128xf32>
      %20 = vector.multi_reduction <add>, %19, %cst_11 [1] : vector<128x128xf32> to vector<128xf32>
      %21 = vector.shape_cast %20 : vector<128xf32> to vector<128x1xf32>
      %cst_12 = arith.constant 1.000000e-24 : f32
      %22 = vector.broadcast %cst_12 : f32 to vector<128x1xf32>
      %23 = arith.maximumf %21, %22 : vector<128x1xf32>
      %24 = math.rsqrt %23 : vector<128x1xf32>
      %25 = vector.broadcast %24 : vector<128x1xf32> to vector<128x128xf32>
      %26 = arith.mulf %18, %25 : vector<128x128xf32>
      %c0_13 = arith.constant 0 : index
      %c0_14 = arith.constant 0 : index
      %27 = vector.load %arg6[%c0_13, %c0_14] : memref<128x128xf32, #tpu.memory_space<vmem>>, vector<128x128xf32>
      tpu.vector_store %arg6[%c0_13, %c0_14], %26 {strides = array<i32>} : memref<128x128xf32, #tpu.memory_space<vmem>>, vector<128x128xf32>,
    } else {
    }
    %c0 = arith.constant 0 : index
    %c0_1 = arith.constant 0 : index
    %3 = vector.load %arg3[%c0, %c0_1] : memref<8x128xf32, #tpu.memory_space<vmem>>, vector<8x128xf32>
    %4 = arith.mulf %3, %3 : vector<8x128xf32>
    %cst = arith.constant dense<0.000000e+00> : vector<8xf32>
    %5 = vector.multi_reduction <add>, %4, %cst [1] : vector<8x128xf32> to vector<8xf32>
    %6 = vector.shape_cast %5 : vector<8xf32> to vector<8x1xf32>
    %cst_2 = arith.constant 1.000000e-24 : f32
    %7 = vector.broadcast %cst_2 : f32 to vector<8x1xf32>
    %8 = arith.maximumf %6, %7 : vector<8x1xf32>
    %9 = math.rsqrt %8 : vector<8x1xf32>
    %c0_3 = arith.constant 0 : index
    %10 = memref.load %arg2[%c0_3] : memref<1xf32, #tpu.memory_space<smem>>
    %11 = vector.broadcast %10 : f32 to vector<8x1xf32>
    %12 = arith.mulf %11, %9 : vector<8x1xf32>
    %13 = vector.broadcast %12 : vector<8x1xf32> to vector<8x128xf32>
    %14 = arith.mulf %3, %13 : vector<8x128xf32>
    %c0_4 = arith.constant 0 : index
    %c0_5 = arith.constant 0 : index
    %15 = vector.load %arg6[%c0_4, %c0_5] : memref<128x128xf32, #tpu.memory_space<vmem>>, vector<128x128xf32>
    %cst_6 = arith.constant dense<0.000000e+00> : vector<8x128xf32>
    %16 = tpu.matmul %14, %15, %cst_6 {dimension_numbers = #tpu.dot_dimension_numbers<[1], [1], [0], [0], [0, 0, 1, 0], [], []>} : vector<8x128xf32>, vector<128x128xf32>, vector<8x128xf32> -> vector<8x128xf32>
    %c0_7 = arith.constant 0 : index
    %c0_8 = arith.constant 0 : index
    %17 = vector.load %arg5[%c0_7, %c0_8] : memref<8x128xf32, #tpu.memory_space<vmem>>, vector<8x128xf32>
    tpu.vector_store %arg5[%c0_7, %c0_8], %16 {strides = array<i32>} : memref<8x128xf32, #tpu.memory_space<vmem>>, vector<8x128xf32>,
    return
  }
  func.func @transform_0(%arg0: i32, %arg1: i32) -> i32 {
    %c0_i32 = arith.constant 0 : i32
    %c0_i32_0 = arith.constant 0 : i32
    return %c0_i32 : i32
  }
  func.func @transform_1(%arg0: i32, %arg1: i32) -> (i32, i32) {
    %c0_i32 = arith.constant 0 : i32
    %c0_i32_0 = arith.constant 0 : i32
    return %arg1, %c0_i32 : i32, i32
  }
  func.func @transform_2(%arg0: i32, %arg1: i32) -> (i32, i32) {
    %c0_i32 = arith.constant 0 : i32
    %c0_i32_0 = arith.constant 0 : i32
    return %arg0, %c0_i32 : i32, i32
  }
  func.func @transform_3(%arg0: i32, %arg1: i32) -> (i32, i32) {
    %c0_i32 = arith.constant 0 : i32
    return %arg1, %arg0 : i32, i32
  }
}

</mosaic_0001>

<llo_original>
// kernel: tpu_custom_call.1
$region0: #{tpu_custom_call.1}
  #allocation0 [shape = 'u32[]', space=smem, size = 0x4, offset = 0x4, fixed_abs, tag = 'smem constant byte address 0x4 - core index']
  #allocation1 [shape = 'u32[144,128]{1,0:T(1,128)}', space=vmem, size = 0x12000, scoped, tag = 'internal scratch']
  #allocation2 [shape = 'f32[128,128]{1,0:T(8,128)}', space=vmem, size = 0x10000, scoped, tag = 'scratch operand']
  #allocation3 [shape = 'f32[1]{0:T(128)S(6)}', space=smem, size = 0x200, scoped, tag = 'scoped memory for tpu_custom_call.1']
  %s0 = inlined_call_operand.<no memory space> [shape: f32[1], index: 0, kind: input, shape index: {}]
  %s1 = inlined_call_operand.hbm [shape: f32[8,128], index: 1, kind: input, shape index: {}]
  %s2 = inlined_call_operand.hbm [shape: f32[128,128], index: 2, kind: input, shape index: {}]
  %s3 = inlined_call_operand.hbm [shape: f32[8,128], index: 3, kind: output, shape index: {}]
  %s4 = sld [smem:[#allocation0]]
  $region34: #{tpu_custom_call.1} parent=0
    _
  %s6 = ssub.s32 1, %s4
  %s7 = scalar_select 0, %s6, %s4
  %8 = sst [smem:[#allocation3]] %s0
  $region1: #{tpu_custom_call.1} parent=0
    #allocation4 [shape = 'u8[4096]{0}', space=vmem, size = 0x1000, scoped, tag = 'input window, operand 1, single buffered']
    #allocation5 [shape = 's32[1]{0}', space=sflag, size = 0x4, scoped, tag = 'scoped memory for tpu_custom_call.1']
    #allocation6 [shape = 's32[1]{0}', space=sflag, size = 0x4, scoped, tag = 'scoped memory for tpu_custom_call.1']
    #allocation7 [shape = 'u8[65536]{0}', space=vmem, size = 0x10000, scoped, tag = 'input window, operand 2, single buffered']
    #allocation8 [shape = 's32[1]{0}', space=sflag, size = 0x4, scoped, tag = 'scoped memory for tpu_custom_call.1']
    #allocation9 [shape = 'u8[4096]{0}', space=vmem, size = 0x1000, scoped, tag = 'output window, operand 0, single buffered']
    %9 = vsyncpa [#allocation5], 0
    %10 = vsyncpa [#allocation8], 0
    %11 = vsyncpa [#allocation6], 0
    // Predicated region
    $region2: #{tpu_custom_call.1} parent=1 // pred_check
      _
    $region3: #{tpu_custom_call.1} parent=1 // pred_check_branch
      %13 = sbr.rel (0) target = $region5
    $region4: #{tpu_custom_call.1} parent=1 // pred_region
      _
    $region5: #{tpu_custom_call.1} parent=1 // pred_fallthru
      _
    // Predicated region
    $region6: #{tpu_custom_call.1} parent=1 // pred_check
      _
    $region7: #{tpu_custom_call.1} parent=1 // pred_check_branch
      %15 = sbr.rel (0) target = $region9
    $region8: #{tpu_custom_call.1} parent=1 // pred_region
      %s17 = ssub.s32 128, 128
      %18 = vsyncadd [#allocation5], %s17
      %s20 = sshll.u32 [#allocation4], 4
      %s21 = int_to_ptr.vmem [resolvable:$true] %s20
      %23 = dma.hbm_to_vmem [thread:$0]  %s1, 128, %s21, [#allocation5]
    $region9: #{tpu_custom_call.1} parent=1 // pred_fallthru
      _
    // Predicated region
    $region10: #{tpu_custom_call.1} parent=1 // pred_check
      _
    $region11: #{tpu_custom_call.1} parent=1 // pred_check_branch
      %25 = sbr.rel (0) target = $region13
    $region12: #{tpu_custom_call.1} parent=1 // pred_region
      %s27 = ssub.s32 2048, 2048
      %28 = vsyncadd [#allocation8], %s27
      %s29 = sshll.u32 [#allocation7], 4
      %s30 = int_to_ptr.vmem [resolvable:$true] %s29
      %35 = dma.hbm_to_vmem [thread:$0]  %s2, 2048, %s30, [#allocation8], 128, 128, 8
    $region13: #{tpu_custom_call.1} parent=1 // pred_fallthru
      _
    // Predicated region
    $region14: #{tpu_custom_call.1} parent=1 // pred_check
      _
    $region15: #{tpu_custom_call.1} parent=1 // pred_check_branch
      %37 = sbr.rel (0) target = $region17
    $region16: #{tpu_custom_call.1} parent=1 // pred_region
      %38 = dma.done [#allocation5], 128
    $region17: #{tpu_custom_call.1} parent=1 // pred_fallthru
      _
    // Predicated region
    $region18: #{tpu_custom_call.1} parent=1 // pred_check
      _
    $region19: #{tpu_custom_call.1} parent=1 // pred_check_branch
      %40 = sbr.rel (0) target = $region21
    $region20: #{tpu_custom_call.1} parent=1 // pred_region
      %41 = dma.done [#allocation8], 2048
    $region21: #{tpu_custom_call.1} parent=1 // pred_fallthru
      _
    %p42 = scmp.eq.s32.totalorder 0, 0
    // Predicated region
    $region22: #{tpu_custom_call.1} parent=1 // pred_check
      %p43 = pneg %p42
    $region23: #{tpu_custom_call.1} parent=1 // pred_check_branch
      %45 = sbr.rel (%p43) target = $region25
    $region24: #{tpu_custom_call.1} parent=1 // pred_region
      %v46 = vld [vmem:[#allocation7] sm:$0xff]
      %v47 = vld [vmem:[#allocation7 + $0x8] sm:$0xff]
      %v48 = vld [vmem:[#allocation7 + $0x10] sm:$0xff]
      %v49 = vld [vmem:[#allocation7 + $0x18] sm:$0xff]
      %v50 = vld [vmem:[#allocation7 + $0x20] sm:$0xff]
      %v51 = vld [vmem:[#allocation7 + $0x28] sm:$0xff]
      %v52 = vld [vmem:[#allocation7 + $0x30] sm:$0xff]
      %v53 = vld [vmem:[#allocation7 + $0x38] sm:$0xff]
      %v54 = vld [vmem:[#allocation7 + $0x40] sm:$0xff]
      %v55 = vld [vmem:[#allocation7 + $0x48] sm:$0xff]
      %v56 = vld [vmem:[#allocation7 + $0x50] sm:$0xff]
      %v57 = vld [vmem:[#allocation7 + $0x58] sm:$0xff]
      %v58 = vld [vmem:[#allocation7 + $0x60] sm:$0xff]
      %v59 = vld [vmem:[#allocation7 + $0x68] sm:$0xff]
      %v60 = vld [vmem:[#allocation7 + $0x70] sm:$0xff]
      %v61 = vld [vmem:[#allocation7 + $0x78] sm:$0xff]
      %v62 = vmul.f32 %v46, %v46
      %v63 = vmul.f32 %v47, %v47
      %v64 = vmul.f32 %v48, %v48
      %v65 = vmul.f32 %v49, %v49
      %v66 = vmul.f32 %v50, %v50
      %v67 = vmul.f32 %v51, %v51
      %v68 = vmul.f32 %v52, %v52
      %v69 = vmul.f32 %v53, %v53
      %v70 = vmul.f32 %v54, %v54
      %v71 = vmul.f32 %v55, %v55
      %v72 = vmul.f32 %v56, %v56
      %v73 = vmul.f32 %v57, %v57
      %v74 = vmul.f32 %v58, %v58
      %v75 = vmul.f32 %v59, %v59
      %v76 = vmul.f32 %v60, %v60
      %v77 = vmul.f32 %v61, %v61
      %78 = vadd.xlane.f32.xlu0 %v62
      %v79 = vpop.xlane.xlu0 %78
      %80 = vadd.xlane.f32.xlu0 %v63
      %v81 = vpop.xlane.xlu0 %80
      %82 = vadd.xlane.f32.xlu0 %v64
      %v83 = vpop.xlane.xlu0 %82
      %84 = vadd.xlane.f32.xlu0 %v65
      %v85 = vpop.xlane.xlu0 %84
      %86 = vadd.xlane.f32.xlu0 %v66
      %v87 = vpop.xlane.xlu0 %86
      %88 = vadd.xlane.f32.xlu0 %v67
      %v89 = vpop.xlane.xlu0 %88
      %90 = vadd.xlane.f32.xlu0 %v68
      %v91 = vpop.xlane.xlu0 %90
      %92 = vadd.xlane.f32.xlu0 %v69
      %v93 = vpop.xlane.xlu0 %92
      %94 = vadd.xlane.f32.xlu0 %v70
      %v95 = vpop.xlane.xlu0 %94
      %96 = vadd.xlane.f32.xlu0 %v71
      %v97 = vpop.xlane.xlu0 %96
      %98 = vadd.xlane.f32.xlu0 %v72
      %v99 = vpop.xlane.xlu0 %98
      %100 = vadd.xlane.f32.xlu0 %v73
      %v101 = vpop.xlane.xlu0 %100
      %102 = vadd.xlane.f32.xlu0 %v74
      %v103 = vpop.xlane.xlu0 %102
      %104 = vadd.xlane.f32.xlu0 %v75
      %v105 = vpop.xlane.xlu0 %104
      %106 = vadd.xlane.f32.xlu0 %v76
      %v107 = vpop.xlane.xlu0 %106
      %108 = vadd.xlane.f32.xlu0 %v77
      %v109 = vpop.xlane.xlu0 %108
      %v110 = vmax.f32 %v79, 1e-24
      %v111 = vmax.f32 %v81, 1e-24
      %v112 = vmax.f32 %v83, 1e-24
      %v113 = vmax.f32 %v85, 1e-24
      %v114 = vmax.f32 %v87, 1e-24
      %v115 = vmax.f32 %v89, 1e-24
      %v116 = vmax.f32 %v91, 1e-24
      %v117 = vmax.f32 %v93, 1e-24
      %v118 = vmax.f32 %v95, 1e-24
      %v119 = vmax.f32 %v97, 1e-24
      %v120 = vmax.f32 %v99, 1e-24
      %v121 = vmax.f32 %v101, 1e-24
      %v122 = vmax.f32 %v103, 1e-24
      %v123 = vmax.f32 %v105, 1e-24
      %v124 = vmax.f32 %v107, 1e-24
      %v125 = vmax.f32 %v109, 1e-24
      %v126 = vrsqrt.pop %v110
      %v127 = vrsqrt.pop %v111
      %v128 = vrsqrt.pop %v112
      %v129 = vrsqrt.pop %v113
      %v130 = vrsqrt.pop %v114
      %v131 = vrsqrt.pop %v115
      %v132 = vrsqrt.pop %v116
      %v133 = vrsqrt.pop %v117
      %v134 = vrsqrt.pop %v118
      %v135 = vrsqrt.pop %v119
      %v136 = vrsqrt.pop %v120
      %v137 = vrsqrt.pop %v121
      %v138 = vrsqrt.pop %v122
      %v139 = vrsqrt.pop %v123
      %v140 = vrsqrt.pop %v124
      %v141 = vrsqrt.pop %v125
      %v142 = vmul.f32 %v46, %v126
      %v143 = vmul.f32 %v47, %v127
      %v144 = vmul.f32 %v48, %v128
      %v145 = vmul.f32 %v49, %v129
      %v146 = vmul.f32 %v50, %v130
      %v147 = vmul.f32 %v51, %v131
      %v148 = vmul.f32 %v52, %v132
      %v149 = vmul.f32 %v53, %v133
      %v150 = vmul.f32 %v54, %v134
      %v151 = vmul.f32 %v55, %v135
      %v152 = vmul.f32 %v56, %v136
      %v153 = vmul.f32 %v57, %v137
      %v154 = vmul.f32 %v58, %v138
      %v155 = vmul.f32 %v59, %v139
      %v156 = vmul.f32 %v60, %v140
      %v157 = vmul.f32 %v61, %v141
      %158 = vst [vmem:[#allocation2] sm:$0xff] %v142
      %159 = vst [vmem:[#allocation2 + $0x8] sm:$0xff] %v143
      %160 = vst [vmem:[#allocation2 + $0x10] sm:$0xff] %v144
      %161 = vst [vmem:[#allocation2 + $0x18] sm:$0xff] %v145
      %162 = vst [vmem:[#allocation2 + $0x20] sm:$0xff] %v146
      %163 = vst [vmem:[#allocation2 + $0x28] sm:$0xff] %v147
      %164 = vst [vmem:[#allocation2 + $0x30] sm:$0xff] %v148
      %165 = vst [vmem:[#allocation2 + $0x38] sm:$0xff] %v149
      %166 = vst [vmem:[#allocation2 + $0x40] sm:$0xff] %v150
      %167 = vst [vmem:[#allocation2 + $0x48] sm:$0xff] %v151
      %168 = vst [vmem:[#allocation2 + $0x50] sm:$0xff] %v152
      %169 = vst [vmem:[#allocation2 + $0x58] sm:$0xff] %v153
      %170 = vst [vmem:[#allocation2 + $0x60] sm:$0xff] %v154
      %171 = vst [vmem:[#allocation2 + $0x68] sm:$0xff] %v155
      %172 = vst [vmem:[#allocation2 + $0x70] sm:$0xff] %v156
      %173 = vst [vmem:[#allocation2 + $0x78] sm:$0xff] %v157
    $region25: #{tpu_custom_call.1} parent=1 // pred_fallthru
      _
    %v174 = vld [vmem:[#allocation4] sm:$0xff]
    %v175 = vmul.f32 %v174, %v174
    %176 = vadd.xlane.f32.xlu0 %v175
    %v177 = vpop.xlane.xlu0 %176
    %v178 = vmax.f32 %v177, 1e-24
    %v179 = vrsqrt.pop %v178
    %s180 = sld [smem:[#allocation3]]
    %v181 = vstv %s180
    %v182 = vmul.f32 %v181, %v179
    %v183 = vmul.f32 %v174, %v182
    %v184 = vld [vmem:[#allocation2] sm:$0xff]
    %v185 = vld [vmem:[#allocation2 + $0x8] sm:$0xff]
    %v186 = vld [vmem:[#allocation2 + $0x10] sm:$0xff]
    %v187 = vld [vmem:[#allocation2 + $0x18] sm:$0xff]
    %v188 = vld [vmem:[#allocation2 + $0x20] sm:$0xff]
    %v189 = vld [vmem:[#allocation2 + $0x28] sm:$0xff]
    %v190 = vld [vmem:[#allocation2 + $0x30] sm:$0xff]
    %v191 = vld [vmem:[#allocation2 + $0x38] sm:$0xff]
    %v192 = vld [vmem:[#allocation2 + $0x40] sm:$0xff]
    %v193 = vld [vmem:[#allocation2 + $0x48] sm:$0xff]
    %v194 = vld [vmem:[#allocation2 + $0x50] sm:$0xff]
    %v195 = vld [vmem:[#allocation2 + $0x58] sm:$0xff]
    %v196 = vld [vmem:[#allocation2 + $0x60] sm:$0xff]
    %v197 = vld [vmem:[#allocation2 + $0x68] sm:$0xff]
    %v198 = vld [vmem:[#allocation2 + $0x70] sm:$0xff]
    %v199 = vld [vmem:[#allocation2 + $0x78] sm:$0xff]
    %200 = vmatprep.subr.mxu0 0.0
    %201 = vmatpush1.xpose.msra.mxu0 %v184
    %202 = vmatprep.subr.mxu0 0.0
    %203 = vmatpush1.xpose.msra.mxu0 %v185
    %204 = vmatprep.subr.mxu0 0.0
    %205 = vmatpush1.xpose.msra.mxu0 %v186
    %206 = vmatprep.subr.mxu0 0.0
    %207 = vmatpush1.xpose.msra.mxu0 %v187
    %208 = vmatprep.subr.mxu0 0.0
    %209 = vmatpush1.xpose.msra.mxu0 %v188
    %210 = vmatprep.subr.mxu0 0.0
    %211 = vmatpush1.xpose.msra.mxu0 %v189
    %212 = vmatprep.subr.mxu0 0.0
    %213 = vmatpush1.xpose.msra.mxu0 %v190
    %214 = vmatprep.subr.mxu0 0.0
    %215 = vmatpush1.xpose.msra.mxu0 %v191
    %216 = vmatprep.subr.mxu0 0.0
    %217 = vmatpush1.xpose.msra.mxu0 %v192
    %218 = vmatprep.subr.mxu0 0.0
    %219 = vmatpush1.xpose.msra.mxu0 %v193
    %220 = vmatprep.subr.mxu0 0.0
    %221 = vmatpush1.xpose.msra.mxu0 %v194
    %222 = vmatprep.subr.mxu0 0.0
    %223 = vmatpush1.xpose.msra.mxu0 %v195
    %224 = vmatprep.subr.mxu0 0.0
    %225 = vmatpush1.xpose.msra.mxu0 %v196
    %226 = vmatprep.subr.mxu0 0.0
    %227 = vmatpush1.xpose.msra.mxu0 %v197
    %228 = vmatprep.subr.mxu0 0.0
    %229 = vmatpush1.xpose.msra.mxu0 %v198
    %230 = vmatprep.subr.mxu0 0.0
    %231 = vmatpush1.xpose.msra.mxu0 %v199
    %232 = vmatprep.subr.mxu0 0.0
    %233 = vmatpush1.xpose.msra.mxu0 0.0
    %234 = vmatprep.subr.mxu0 0.0
    %235 = vmatpush1.xpose.msra.mxu0 0.0
    %236 = vmatprep.subr.mxu0 0.0
    %237 = vmatpush1.xpose.msra.mxu0 0.0
    %238 = vmatprep.subr.mxu0 0.0
    %239 = vmatpush1.xpose.msra.mxu0 0.0
    %240 = vmatprep.subr.mxu0 0.0
    %241 = vmatpush1.xpose.msra.mxu0 0.0
    %242 = vmatprep.subr.mxu0 0.0
    %243 = vmatpush1.xpose.msra.mxu0 0.0
    %244 = vmatprep.subr.mxu0 0.0
    %245 = vmatpush1.xpose.msra.mxu0 0.0
    %246 = vmatprep.subr.mxu0 0.0
    %247 = vmatpush1.xpose.msra.mxu0 0.0
    %248 = vmatprep.subr.mxu0 0.0
    %249 = vmatpush1.xpose.msra.mxu0 0.0
    %250 = vmatprep.subr.mxu0 0.0
    %251 = vmatpush1.xpose.msra.mxu0 0.0
    %252 = vmatprep.subr.mxu0 0.0
    %253 = vmatpush1.xpose.msra.mxu0 0.0
    %254 = vmatprep.subr.mxu0 0.0
    %255 = vmatpush1.xpose.msra.mxu0 0.0
    %256 = vmatprep.subr.mxu0 0.0
    %257 = vmatpush1.xpose.msra.mxu0 0.0
    %258 = vmatprep.subr.mxu0 0.0
    %259 = vmatpush1.xpose.msra.mxu0 0.0
    %260 = vmatprep.subr.mxu0 0.0
    %261 = vmatpush1.xpose.msra.mxu0 0.0
    %262 = vmatprep.subr.mxu0 0.0
    %263 = vmatpush1.xpose.msra.mxu0 0.0
    %264 = vmatprep.mubr.f32.mxu0 0.0
    %265 = vmatmul.mubr.f32.gmra.mrb[0].mxu0 %v183
    %v266 = vpop.f32.mrb[0].mxu0
    %v267 = vadd.f32 0.0, %v266
    %v268 = vpop.f32.mrb[0].mxu0
    %269 = vdwg.mxu0
    %270 = vst [vmem:[#allocation9] sm:$0xff] %v267
    // Predicated region
    $region26: #{tpu_custom_call.1} parent=1 // pred_check
      _
    $region27: #{tpu_custom_call.1} parent=1 // pred_check_branch
      %272 = sbr.rel (0) target = $region29
    $region28: #{tpu_custom_call.1} parent=1 // pred_region
      %s274 = ssub.s32 128, 128
      %275 = vsyncadd [#allocation6], %s274
      %s277 = sshll.u32 [#allocation9], 4
      %s278 = int_to_ptr.vmem [resolvable:$true] %s277
      %280 = dma.vmem_to_hbm [thread:$0]  %s278, 128, %s3, [#allocation6]
    $region29: #{tpu_custom_call.1} parent=1 // pred_fallthru
      _
    // Predicated region
    $region30: #{tpu_custom_call.1} parent=1 // pred_check
      _
    $region31: #{tpu_custom_call.1} parent=1 // pred_check_branch
      %282 = sbr.rel (0) target = $region33
    $region32: #{tpu_custom_call.1} parent=1 // pred_region
      %283 = dma.done [#allocation6], 128
    $region33: #{tpu_custom_call.1} parent=1 // pred_fallthru
      _
    %284 = vsyncpa [#allocation5], 1
    %285 = vsyncpa [#allocation8], 1
    %286 = vsyncpa [#allocation6], 1

</llo_original>
